<compile_context>
chip_gen: v6e
topology: v6e:2x2x1
jax: 0.10.0
libtpu: 0.0.40
codegen_flags: <defaults>
</compile_context>

<pallas_src>
import functools

import jax
import jax.numpy as jnp
from jax.experimental import pallas as pl
from jax.experimental.pallas import tpu as pltpu


LN_EPS = 1e-5          # PyTorch nn.LayerNorm default
_LANES = 128           # TPU lane width
_SUBLANES = 8          # TPU sublane width


def _round_up(n, m):
    return -(-n // m) * m


def _citation_head_kernel(x_ref, w1_ref, b1_ref, g_ref, beta_ref, w2_ref, b2_ref,
                          o_ref, *, hidden_true, out_dim, approximate_gelu):
    # Cast x to the matmul dtype in-register (no extra wrapper-side HBM pass).
    x = x_ref[...].astype(w1_ref.dtype)

    # ---- Linear 1: [tb, d_model] @ [d_model, hidden_p]  (MXU, f32 accumulation) ----
    h = jnp.dot(x, w1_ref[...], preferred_element_type=jnp.float32)
    h = h + b1_ref[...]                       # f32 bias; padded lanes stay exactly 0

    # ---- GELU ----
    if approximate_gelu:
        # tanh approximation -> transcendental moves to the EUP slot (v6e/v7x
        # VALU relief); deviates ~1e-3 from torch.nn.GELU's default exact erf.
        h = jax.nn.gelu(h, approximate=True)
    else:
        # exact erf-based GELU, matching torch.nn.GELU() default.
        inv_sqrt2 = jnp.float32(0.7071067811865476)
        h = jnp.float32(0.5) * h * (jnp.float32(1.0) + jax.lax.erf(h * inv_sqrt2))

    # ---- LayerNorm over the TRUE hidden width, fused single-pass statistics ----
    # Padded hidden lanes of h are exactly zero (zero-padded w1/b1, GELU(0)=0),
    # so sum / sum-of-squares over the padded width divided by hidden_true give
    # the exact mean / E[h^2] of the un-padded tensor.
    inv_n = jnp.float32(1.0 / hidden_true)
    s1 = jnp.sum(h, axis=-1, keepdims=True)
    s2 = jnp.sum(h * h, axis=-1, keepdims=True)
    mean = s1 * inv_n
    var = jnp.maximum(s2 * inv_n - mean * mean, jnp.float32(0.0))
    hn = (h - mean) * jax.lax.rsqrt(var + jnp.float32(LN_EPS))
    # gamma/beta are zero on padded lanes -> padded lanes of hn become exactly 0.
    hn = hn * g_ref[...] + beta_ref[...]

    # ---- Linear 2: [tb, hidden_p] @ [hidden_p, out_p]  (MXU, f32 accumulation) ----
    out = jnp.dot(hn.astype(w2_ref.dtype), w2_ref[...],
                  preferred_element_type=jnp.float32)
    # Store only the true out_dim lanes: unpadded output, no post-kernel slice.
    o_ref[...] = (out[:, :out_dim] + b2_ref[...]).astype(o_ref.dtype)


def prepare_params(params, weight_dtype=jnp.bfloat16):
    """One-time weight preparation (hoist OUT of the hot path).

    Pads feature axes to lane (128) multiples and casts the matmul weights to
    `weight_dtype`.  Returns (prepared_params, hidden_true).
    """
    hidden = params["w1"].shape[1]
    out_dim = params["w2"].shape[1]
    hidden_p = _round_up(hidden, _LANES)
    out_p = _round_up(out_dim, _LANES)
    f32 = jnp.float32
    prep = {
        "w1": jnp.pad(params["w1"],
                      ((0, 0), (0, hidden_p - hidden))).astype(weight_dtype),
        "b1": jnp.pad(params["b1"].reshape(1, -1).astype(f32),
                      ((0, 0), (0, hidden_p - hidden))),
        "gamma": jnp.pad(params["gamma"].reshape(1, -1).astype(f32),
                         ((0, 0), (0, hidden_p - hidden))),
        "beta": jnp.pad(params["beta"].reshape(1, -1).astype(f32),
                        ((0, 0), (0, hidden_p - hidden))),
        "w2": jnp.pad(params["w2"],
                      ((0, hidden_p - hidden),
                       (0, out_p - out_dim))).astype(weight_dtype),
        "b2": params["b2"].reshape(1, -1).astype(f32),      # kept UNPADDED
    }
    return prep, hidden


@functools.partial(jax.jit,
                   static_argnames=("hidden_true", "block_b", "approximate_gelu"))
def arit_citation_head(x, prep, *, hidden_true, block_b=None,
                       approximate_gelu=False):
    """x: [batch, d_model] (f32 or bf16). Returns [batch, 2*horizons] f32."""
    batch, d_model = x.shape
    hidden_p = prep["w1"].shape[1]
    out_p = prep["w2"].shape[1]
    out_dim = prep["b2"].shape[1]

    # --- batch tiling: large tiles amortize the ~0.35 us per-grid-step overhead;
    # cap at ceil(batch/2) rows so there are >= 2 grid steps whenever batch
    # allows it (v7x has 2 TensorCores sharding the "parallel" axis). ---
    tb = 2048 if block_b is None else block_b
    tb = min(tb,
             _round_up(batch, _SUBLANES),
             _round_up(-(-batch // 2), _SUBLANES))
    tb = _round_up(max(tb, _SUBLANES), _SUBLANES)
    grid = (pl.cdiv(batch, tb),)

    # --- VMEM sizing: generous but capped at 48 MiB so it also fits v7x (64 MiB). ---
    x_bytes = x.dtype.itemsize
    w_bytes = prep["w1"].dtype.itemsize
    vmem_est = (
        2 * (d_model * hidden_p + hidden_p * out_p) * w_bytes      # resident weights (x2 buffers)
        + 2 * (3 * hidden_p + out_dim) * 4                         # bias / LN vectors
        + 2 * tb * d_model * x_bytes                               # x tile, double-buffered
        + 2 * tb * out_dim * 4                                     # out tile, double-buffered
        + 6 * tb * hidden_p * 4                                    # f32 h/hn temporaries headroom
    )
    vmem_limit = int(min(max(vmem_est, 32 * 1024 * 1024), 48 * 1024 * 1024))

    flops = 2 * batch * (d_model * hidden_p + hidden_p * out_p)
    bytes_accessed = (
        batch * d_model * x_bytes
        + (d_model * hidden_p + hidden_p * out_p) * w_bytes
        + (3 * hidden_p + out_dim) * 4
        + batch * out_dim * 4
    )

    kernel = functools.partial(_citation_head_kernel,
                               hidden_true=hidden_true,
                               out_dim=out_dim,
                               approximate_gelu=approximate_gelu)
    full = lambda shape: pl.BlockSpec(shape, lambda i: (0,) * len(shape))

    return pl.pallas_call(
        kernel,
        out_shape=jax.ShapeDtypeStruct((batch, out_dim), jnp.float32),
        grid_spec=pltpu.PrefetchScalarGridSpec(
            num_scalar_prefetch=0,
            grid=grid,
            in_specs=[
                pl.BlockSpec((tb, d_model), lambda i: (i, 0)),    # x (batch-tiled, ragged OK)
                full((d_model, hidden_p)),                         # w1 (resident)
                full((1, hidden_p)),                               # b1
                full((1, hidden_p)),                               # gamma
                full((1, hidden_p)),                               # beta
                full((hidden_p, out_p)),                           # w2 (resident, lane-padded)
                full((1, out_dim)),                                # b2 (unpadded)
            ],
            out_specs=pl.BlockSpec((tb, out_dim), lambda i: (i, 0)),
        ),
        compiler_params=pltpu.CompilerParams(
            dimension_semantics=("parallel",),      # batch axis shards across TCs
            vmem_limit_bytes=vmem_limit,
        ),
        cost_estimate=pl.CostEstimate(
            flops=flops,
            transcendentals=batch * hidden_p,
            bytes_accessed=bytes_accessed,
        ),
    )(x, prep["w1"], prep["b1"], prep["gamma"], prep["beta"], prep["w2"],
      prep["b2"])


def init_params(key, d_model, hidden_dim, horizons):
    """Deterministic, PyTorch-Linear-style uniform(-1/sqrt(fan_in), +1/sqrt(fan_in)) init."""
    k1, k2, k3, k4 = jax.random.split(key, 4)
    lim1 = 1.0 / jnp.sqrt(d_model)
    lim2 = 1.0 / jnp.sqrt(hidden_dim)
    out_dim = 2 * horizons
    return {
        "w1": jax.random.uniform(k1, (d_model, hidden_dim), jnp.float32, -lim1, lim1),
        "b1": jax.random.uniform(k2, (1, hidden_dim), jnp.float32, -lim1, lim1),
        "gamma": jnp.ones((1, hidden_dim), jnp.float32),   # LayerNorm weight
        "beta": jnp.zeros((1, hidden_dim), jnp.float32),   # LayerNorm bias
        "w2": jax.random.uniform(k3, (hidden_dim, out_dim), jnp.float32, -lim2, lim2),
        "b2": jax.random.uniform(k4, (1, out_dim), jnp.float32, -lim2, lim2),
    }


def _reference(x, p):
    """Pure-JAX f32 reference of the PyTorch forward, for a sanity check."""
    h = x @ p["w1"] + p["b1"]
    h = 0.5 * h * (1.0 + jax.lax.erf(h / jnp.sqrt(2.0)))
    mean = jnp.mean(h, axis=-1, keepdims=True)
    var = jnp.mean((h - mean) ** 2, axis=-1, keepdims=True)
    hn = (h - mean) / jnp.sqrt(var + LN_EPS)
    hn = hn * p["gamma"] + p["beta"]
    return hn @ p["w2"] + p["b2"]


if __name__ == "__main__":
    d_model, hidden_dim, horizons = 32, 32, 4
    batch = 8

    key = jax.random.PRNGKey(0)
    kx, kp = jax.random.split(key)
    x = jax.random.normal(kx, (batch, d_model), jnp.float32)
    params = init_params(kp, d_model, hidden_dim, horizons)

    ref = _reference(x, params)

    # f32-weight path: validates the padded / fused-LN / unpadded-store math tightly.
    prep_f32, hidden_true = prepare_params(params, weight_dtype=jnp.float32)
    out_f32 = jax.block_until_ready(
        arit_citation_head(x, prep_f32, hidden_true=hidden_true))
    assert out_f32.shape == (batch, 2 * horizons), out_f32.shape
    assert jnp.allclose(out_f32, ref, atol=1e-3, rtol=1e-3), \
        float(jnp.max(jnp.abs(out_f32 - ref)))

    # Ragged batch (not a multiple of the tile) exercises the unpadded grid path.
    x13 = jax.random.normal(jax.random.PRNGKey(7), (13, d_model), jnp.float32)
    out13 = jax.block_until_ready(
        arit_citation_head(x13, prep_f32, hidden_true=hidden_true))
    assert out13.shape == (13, 2 * horizons), out13.shape
    assert jnp.allclose(out13, _reference(x13, params), atol=1e-3, rtol=1e-3), \
        float(jnp.max(jnp.abs(out13 - _reference(x13, params))))

    # Default bf16-weight fast path (looser tolerance due to bf16 MXU inputs).
    prep_bf16, hidden_true = prepare_params(params)      # bf16 weights
    out = jax.block_until_ready(
        arit_citation_head(x, prep_bf16, hidden_true=hidden_true))
    assert out.shape == (batch, 2 * horizons), out.shape
    assert jnp.allclose(out, ref, atol=5e-2, rtol=5e-2), \
        float(jnp.max(jnp.abs(out - ref)))

    print("KERNEL_OK")
</pallas_src>

<mosaic_0001>
module attributes {stable_mosaic.version = 11 : i64} {
  func.func @_citation_head_kernel(%arg0: i32, %arg1: memref<8x32xf32, #tpu.memory_space<vmem>>, %arg2: memref<32x128xf32, #tpu.memory_space<vmem>>, %arg3: memref<1x128xf32, #tpu.memory_space<vmem>>, %arg4: memref<1x128xf32, #tpu.memory_space<vmem>>, %arg5: memref<1x128xf32, #tpu.memory_space<vmem>>, %arg6: memref<128x128xf32, #tpu.memory_space<vmem>>, %arg7: memref<1x8xf32, #tpu.memory_space<vmem>>, %arg8: memref<8x8xf32, #tpu.memory_space<vmem>>) attributes {dimension_semantics = [#tpu.dimension_semantics<parallel>], iteration_bounds = array<i64: 1>, scalar_prefetch = 0 : i64, scratch_operands = 0 : i64, tpu.core_type = #tpu.core_type<tc>, window_params = [{transform_indices = @transform_0, window_bounds = array<i64: 8, 32>}, {pipeline_mode = #tpu.pipeline_mode<synchronous>, transform_indices = @transform_1, window_bounds = array<i64: 32, 128>}, {pipeline_mode = #tpu.pipeline_mode<synchronous>, transform_indices = @transform_2, window_bounds = array<i64: 1, 128>}, {pipeline_mode = #tpu.pipeline_mode<synchronous>, transform_indices = @transform_3, window_bounds = array<i64: 1, 128>}, {pipeline_mode = #tpu.pipeline_mode<synchronous>, transform_indices = @transform_4, window_bounds = array<i64: 1, 128>}, {pipeline_mode = #tpu.pipeline_mode<synchronous>, transform_indices = @transform_5, window_bounds = array<i64: 128, 128>}, {pipeline_mode = #tpu.pipeline_mode<synchronous>, transform_indices = @transform_6, window_bounds = array<i64: 1, 8>}, {transform_indices = @transform_7, window_bounds = array<i64: 8, 8>}]} {
    %c0 = arith.constant 0 : index
    %c0_0 = arith.constant 0 : index
    %0 = vector.load %arg1[%c0, %c0_0] : memref<8x32xf32, #tpu.memory_space<vmem>>, vector<8x32xf32>
    %c0_1 = arith.constant 0 : index
    %c0_2 = arith.constant 0 : index
    %1 = vector.load %arg2[%c0_1, %c0_2] : memref<32x128xf32, #tpu.memory_space<vmem>>, vector<32x128xf32>
    %cst = arith.constant dense<0.000000e+00> : vector<8x128xf32>
    %2 = tpu.matmul %0, %1, %cst {dimension_numbers = #tpu.dot_dimension_numbers<[1], [0], [0], [1], [0, 0, 1, 1], [], []>} : vector<8x32xf32>, vector<32x128xf32>, vector<8x128xf32> -> vector<8x128xf32>
    %c0_3 = arith.constant 0 : index
    %c0_4 = arith.constant 0 : index
    %3 = vector.load %arg3[%c0_3, %c0_4] : memref<1x128xf32, #tpu.memory_space<vmem>>, vector<1x128xf32>
    %4 = vector.broadcast %3 : vector<1x128xf32> to vector<8x128xf32>
    %5 = arith.addf %2, %4 : vector<8x128xf32>
    %cst_5 = arith.constant 5.000000e-01 : f32
    %6 = vector.broadcast %cst_5 : f32 to vector<8x128xf32>
    %7 = arith.mulf %6, %5 : vector<8x128xf32>
    %cst_6 = arith.constant 0.707106769 : f32
    %8 = vector.broadcast %cst_6 : f32 to vector<8x128xf32>
    %9 = arith.mulf %5, %8 : vector<8x128xf32>
    %10 = math.erf %9 : vector<8x128xf32>
    %cst_7 = arith.constant 1.000000e+00 : f32
    %11 = vector.broadcast %cst_7 : f32 to vector<8x128xf32>
    %12 = arith.addf %11, %10 : vector<8x128xf32>
    %13 = arith.mulf %7, %12 : vector<8x128xf32>
    %cst_8 = arith.constant dense<0.000000e+00> : vector<8xf32>
    %14 = vector.multi_reduction <add>, %13, %cst_8 [1] : vector<8x128xf32> to vector<8xf32>
    %15 = vector.shape_cast %14 : vector<8xf32> to vector<8x1xf32>
    %16 = arith.mulf %13, %13 : vector<8x128xf32>
    %cst_9 = arith.constant dense<0.000000e+00> : vector<8xf32>
    %17 = vector.multi_reduction <add>, %16, %cst_9 [1] : vector<8x128xf32> to vector<8xf32>
    %18 = vector.shape_cast %17 : vector<8xf32> to vector<8x1xf32>
    %cst_10 = arith.constant 3.125000e-02 : f32
    %19 = vector.broadcast %cst_10 : f32 to vector<8x1xf32>
    %20 = arith.mulf %15, %19 : vector<8x1xf32>
    %cst_11 = arith.constant 3.125000e-02 : f32
    %21 = vector.broadcast %cst_11 : f32 to vector<8x1xf32>
    %22 = arith.mulf %18, %21 : vector<8x1xf32>
    %23 = arith.mulf %20, %20 : vector<8x1xf32>
    %24 = arith.subf %22, %23 : vector<8x1xf32>
    %cst_12 = arith.constant 0.000000e+00 : f32
    %25 = vector.broadcast %cst_12 : f32 to vector<8x1xf32>
    %26 = arith.maximumf %24, %25 : vector<8x1xf32>
    %27 = vector.broadcast %20 : vector<8x1xf32> to vector<8x128xf32>
    %28 = arith.subf %13, %27 : vector<8x128xf32>
    %cst_13 = arith.constant 9.99999974E-6 : f32
    %29 = vector.broadcast %cst_13 : f32 to vector<8x1xf32>
    %30 = arith.addf %26, %29 : vector<8x1xf32>
    %31 = math.rsqrt %30 : vector<8x1xf32>
    %32 = vector.broadcast %31 : vector<8x1xf32> to vector<8x128xf32>
    %33 = arith.mulf %28, %32 : vector<8x128xf32>
    %c0_14 = arith.constant 0 : index
    %c0_15 = arith.constant 0 : index
    %34 = vector.load %arg4[%c0_14, %c0_15] : memref<1x128xf32, #tpu.memory_space<vmem>>, vector<1x128xf32>
    %35 = vector.broadcast %34 : vector<1x128xf32> to vector<8x128xf32>
    %36 = arith.mulf %33, %35 : vector<8x128xf32>
    %c0_16 = arith.constant 0 : index
    %c0_17 = arith.constant 0 : index
    %37 = vector.load %arg5[%c0_16, %c0_17] : memref<1x128xf32, #tpu.memory_space<vmem>>, vector<1x128xf32>
    %38 = vector.broadcast %37 : vector<1x128xf32> to vector<8x128xf32>
    %39 = arith.addf %36, %38 : vector<8x128xf32>
    %c0_18 = arith.constant 0 : index
    %c0_19 = arith.constant 0 : index
    %40 = vector.load %arg6[%c0_18, %c0_19] : memref<128x128xf32, #tpu.memory_space<vmem>>, vector<128x128xf32>
    %cst_20 = arith.constant dense<0.000000e+00> : vector<8x128xf32>
    %41 = tpu.matmul %39, %40, %cst_20 {dimension_numbers = #tpu.dot_dimension_numbers<[1], [0], [0], [1], [0, 0, 1, 1], [], []>} : vector<8x128xf32>, vector<128x128xf32>, vector<8x128xf32> -> vector<8x128xf32>
    %42 = vector.extract_strided_slice %41 {offsets = [0, 0], sizes = [8, 8], strides = [1, 1]} : vector<8x128xf32> to vector<8x8xf32>
    %c0_21 = arith.constant 0 : index
    %c0_22 = arith.constant 0 : index
    %43 = vector.load %arg7[%c0_21, %c0_22] : memref<1x8xf32, #tpu.memory_space<vmem>>, vector<1x8xf32>
    %44 = vector.broadcast %43 : vector<1x8xf32> to vector<8x8xf32>
    %45 = arith.addf %42, %44 : vector<8x8xf32>
    %c0_23 = arith.constant 0 : index
    %c0_24 = arith.constant 0 : index
    %46 = vector.load %arg8[%c0_23, %c0_24] : memref<8x8xf32, #tpu.memory_space<vmem>>, vector<8x8xf32>
    tpu.vector_store %arg8[%c0_23, %c0_24], %45 {strides = array<i32>} : memref<8x8xf32, #tpu.memory_space<vmem>>, vector<8x8xf32>,
    return
  }
  func.func @transform_0(%arg0: i32) -> (i32, i32) {
    %c0_i32 = arith.constant 0 : i32
    %c0_i32_0 = arith.constant 0 : i32
    return %arg0, %c0_i32 : i32, i32
  }
  func.func @transform_1(%arg0: i32) -> (i32, i32) {
    %c0_i32 = arith.constant 0 : i32
    %c0_i32_0 = arith.constant 0 : i32
    %c0_i32_1 = arith.constant 0 : i32
    return %c0_i32, %c0_i32_0 : i32, i32
  }
  func.func @transform_2(%arg0: i32) -> (i32, i32) {
    %c0_i32 = arith.constant 0 : i32
    %c0_i32_0 = arith.constant 0 : i32
    %c0_i32_1 = arith.constant 0 : i32
    return %c0_i32, %c0_i32_0 : i32, i32
  }
  func.func @transform_3(%arg0: i32) -> (i32, i32) {
    %c0_i32 = arith.constant 0 : i32
    %c0_i32_0 = arith.constant 0 : i32
    %c0_i32_1 = arith.constant 0 : i32
    return %c0_i32, %c0_i32_0 : i32, i32
  }
  func.func @transform_4(%arg0: i32) -> (i32, i32) {
    %c0_i32 = arith.constant 0 : i32
    %c0_i32_0 = arith.constant 0 : i32
    %c0_i32_1 = arith.constant 0 : i32
    return %c0_i32, %c0_i32_0 : i32, i32
  }
  func.func @transform_5(%arg0: i32) -> (i32, i32) {
    %c0_i32 = arith.constant 0 : i32
    %c0_i32_0 = arith.constant 0 : i32
    %c0_i32_1 = arith.constant 0 : i32
    return %c0_i32, %c0_i32_0 : i32, i32
  }
  func.func @transform_6(%arg0: i32) -> (i32, i32) {
    %c0_i32 = arith.constant 0 : i32
    %c0_i32_0 = arith.constant 0 : i32
    %c0_i32_1 = arith.constant 0 : i32
    return %c0_i32, %c0_i32_0 : i32, i32
  }
  func.func @transform_7(%arg0: i32) -> (i32, i32) {
    %c0_i32 = arith.constant 0 : i32
    %c0_i32_0 = arith.constant 0 : i32
    return %arg0, %c0_i32 : i32, i32
  }
}

</mosaic_0001>

<llo_original>
// kernel: arit_citation_head.1
$region0: #{arit_citation_head.1}
  #allocation0 [shape = 'u32[]', space=smem, size = 0x4, offset = 0x4, fixed_abs, tag = 'smem constant byte address 0x4 - core index']
  #allocation1 [shape = 'u32[144,128]{1,0:T(1,128)}', space=vmem, size = 0x12000, scoped, tag = 'internal scratch']
  %s0 = inlined_call_operand.hbm [shape: f32[8,32], index: 0, kind: input, shape index: {}]
  %s1 = inlined_call_operand.hbm [shape: f32[32,128], index: 1, kind: input, shape index: {}]
  %s2 = inlined_call_operand.vmem [shape: f32[1,128], index: 2, kind: input, shape index: {}]
  %s3 = inlined_call_operand.vmem [shape: f32[1,128], index: 3, kind: input, shape index: {}]
  %s4 = inlined_call_operand.vmem [shape: f32[1,128], index: 4, kind: input, shape index: {}]
  %s5 = inlined_call_operand.hbm [shape: f32[128,128], index: 5, kind: input, shape index: {}]
  %s6 = inlined_call_operand.hbm [shape: f32[1,8], index: 6, kind: input, shape index: {}]
  %s7 = inlined_call_operand.hbm [shape: f32[8,8], index: 7, kind: output, shape index: {}]
  %s8 = sld [smem:[#allocation0]]
  $region54: #{arit_citation_head.1} parent=0
    _
  %s10 = ssub.s32 1, %s8
  %s11 = scalar_select 0, %s10, %s8
  $region1: #{arit_citation_head.1} parent=0
    #allocation2 [shape = 'u8[4096]{0}', space=vmem, size = 0x1000, scoped, tag = 'input window, operand 0, single buffered']
    #allocation3 [shape = 's32[1]{0}', space=sflag, size = 0x4, scoped, tag = 'scoped memory for arit_citation_head.1']
    #allocation4 [shape = 's32[1]{0}', space=sflag, size = 0x4, scoped, tag = 'scoped memory for arit_citation_head.1']
    #allocation5 [shape = 'u8[16384]{0}', space=vmem, size = 0x4000, scoped, tag = 'input window, operand 1, single buffered']
    #allocation6 [shape = 's32[1]{0}', space=sflag, size = 0x4, scoped, tag = 'scoped memory for arit_citation_head.1']
    #allocation7 [shape = 'u8[65536]{0}', space=vmem, size = 0x10000, scoped, tag = 'input window, operand 5, single buffered']
    #allocation8 [shape = 'u8[512]{0}', space=vmem, size = 0x400, scoped, tag = 'input window, operand 6, single buffered']
    #allocation9 [shape = 's32[1]{0}', space=sflag, size = 0x4, scoped, tag = 'scoped memory for arit_citation_head.1']
    #allocation10 [shape = 'u8[4096]{0}', space=vmem, size = 0x1000, scoped, tag = 'output window, operand 0, single buffered']
    %12 = vsyncpa [#allocation3], 0
    %13 = vsyncpa [#allocation6], 0
    %14 = vsyncpa [#allocation9], 0
    %15 = vsyncpa [#allocation4], 0
    // Predicated region
    $region2: #{arit_citation_head.1} parent=1 // pred_check
      _
    $region3: #{arit_citation_head.1} parent=1 // pred_check_branch
      %17 = sbr.rel (0) target = $region5
    $region4: #{arit_citation_head.1} parent=1 // pred_region
      %s19 = ssub.s32 128, 128
      %20 = vsyncadd [#allocation3], %s19
      %s22 = sshll.u32 [#allocation2], 4
      %s23 = int_to_ptr.vmem [resolvable:$true] %s22
      %25 = dma.hbm_to_vmem [thread:$0]  %s0, 128, %s23, [#allocation3]
    $region5: #{arit_citation_head.1} parent=1 // pred_fallthru
      _
    // Predicated region
    $region6: #{arit_citation_head.1} parent=1 // pred_check
      _
    $region7: #{arit_citation_head.1} parent=1 // pred_check_branch
      %27 = sbr.rel (0) target = $region9
    $region8: #{arit_citation_head.1} parent=1 // pred_region
      %s29 = ssub.s32 512, 512
      %30 = vsyncadd [#allocation6], %s29
      %s31 = sshll.u32 [#allocation5], 4
      %s32 = int_to_ptr.vmem [resolvable:$true] %s31
      %37 = dma.hbm_to_vmem [thread:$0]  %s1, 512, %s32, [#allocation6], 128, 128, 8
    $region9: #{arit_citation_head.1} parent=1 // pred_fallthru
      _
    // Predicated region
    $region10: #{arit_citation_head.1} parent=1 // pred_check
      _
    $region11: #{arit_citation_head.1} parent=1 // pred_check_branch
      %39 = sbr.rel (0) target = $region13
    $region12: #{arit_citation_head.1} parent=1 // pred_region
      _
    $region13: #{arit_citation_head.1} parent=1 // pred_fallthru
      _
    // Predicated region
    $region14: #{arit_citation_head.1} parent=1 // pred_check
      _
    $region15: #{arit_citation_head.1} parent=1 // pred_check_branch
      %41 = sbr.rel (0) target = $region17
    $region16: #{arit_citation_head.1} parent=1 // pred_region
      _
    $region17: #{arit_citation_head.1} parent=1 // pred_fallthru
      _
    // Predicated region
    $region18: #{arit_citation_head.1} parent=1 // pred_check
      _
    $region19: #{arit_citation_head.1} parent=1 // pred_check_branch
      %43 = sbr.rel (0) target = $region21
    $region20: #{arit_citation_head.1} parent=1 // pred_region
      _
    $region21: #{arit_citation_head.1} parent=1 // pred_fallthru
      _
    // Predicated region
    $region22: #{arit_citation_head.1} parent=1 // pred_check
      _
    $region23: #{arit_citation_head.1} parent=1 // pred_check_branch
      %45 = sbr.rel (0) target = $region25
    $region24: #{arit_citation_head.1} parent=1 // pred_region
      %s47 = ssub.s32 2048, 2048
      %48 = vsyncadd [#allocation6], %s47
      %s49 = sshll.u32 [#allocation7], 4
      %s50 = int_to_ptr.vmem [resolvable:$true] %s49
      %55 = dma.hbm_to_vmem [thread:$0]  %s5, 2048, %s50, [#allocation6], 128, 128, 8
    $region25: #{arit_citation_head.1} parent=1 // pred_fallthru
      _
    // Predicated region
    $region26: #{arit_citation_head.1} parent=1 // pred_check
      _
    $region27: #{arit_citation_head.1} parent=1 // pred_check_branch
      %57 = sbr.rel (0) target = $region29
    $region28: #{arit_citation_head.1} parent=1 // pred_region
      %s59 = ssub.s32 16, 16
      %60 = vsyncadd [#allocation9], %s59
      %s62 = sshll.u32 [#allocation8], 4
      %s63 = int_to_ptr.vmem [resolvable:$true] %s62
      %65 = dma.hbm_to_vmem [thread:$0]  %s6, 16, %s63, [#allocation9]
    $region29: #{arit_citation_head.1} parent=1 // pred_fallthru
      _
    // Predicated region
    $region30: #{arit_citation_head.1} parent=1 // pred_check
      _
    $region31: #{arit_citation_head.1} parent=1 // pred_check_branch
      %67 = sbr.rel (0) target = $region33
    $region32: #{arit_citation_head.1} parent=1 // pred_region
      %68 = dma.done [#allocation3], 128
    $region33: #{arit_citation_head.1} parent=1 // pred_fallthru
      _
    // Predicated region
    $region34: #{arit_citation_head.1} parent=1 // pred_check
      _
    $region35: #{arit_citation_head.1} parent=1 // pred_check_branch
      %70 = sbr.rel (0) target = $region37
    $region36: #{arit_citation_head.1} parent=1 // pred_region
      %71 = dma.done [#allocation6], 512
    $region37: #{arit_citation_head.1} parent=1 // pred_fallthru
      _
    // Predicated region
    $region38: #{arit_citation_head.1} parent=1 // pred_check
      _
    $region39: #{arit_citation_head.1} parent=1 // pred_check_branch
      %73 = sbr.rel (0) target = $region41
    $region40: #{arit_citation_head.1} parent=1 // pred_region
      %74 = dma.done [#allocation6], 2048
    $region41: #{arit_citation_head.1} parent=1 // pred_fallthru
      _
    // Predicated region
    $region42: #{arit_citation_head.1} parent=1 // pred_check
      _
    $region43: #{arit_citation_head.1} parent=1 // pred_check_branch
      %76 = sbr.rel (0) target = $region45
    $region44: #{arit_citation_head.1} parent=1 // pred_region
      %77 = dma.done [#allocation9], 16
    $region45: #{arit_citation_head.1} parent=1 // pred_fallthru
      _
    %v78 = vld [vmem:[#allocation2] sm:$0xff]
    %v79 = vld [vmem:[#allocation5] sm:$0xff]
    %v80 = vld [vmem:[#allocation5 + $0x8] sm:$0xff]
    %v81 = vld [vmem:[#allocation5 + $0x10] sm:$0xff]
    %v82 = vld [vmem:[#allocation5 + $0x18] sm:$0xff]
    %v83 = vld [vmem:[%s2] sm:$0x1]
    %v85 = vlaneseq
    %v86 = vshrl.u32 %v85, 7
    %v87 = vsub.s32 0, %v86
    %v88 = vrot.slane %v83, %v87
    %vm90 = vcmask 261120
    %v92 = vsel %vm90, %v78, 0
    %94 = vmatprep.subr.mxu0 0.0
    %95 = vmatpush1.msra.mxu0 0.0
    %96 = vmatprep.subr.mxu0 0.0
    %97 = vmatpush1.msra.mxu0 0.0
    %98 = vmatprep.subr.mxu0 0.0
    %99 = vmatpush1.msra.mxu0 0.0
    %100 = vmatprep.subr.mxu0 0.0
    %101 = vmatpush1.msra.mxu0 0.0
    %102 = vmatprep.subr.mxu0 0.0
    %103 = vmatpush1.msra.mxu0 0.0
    %104 = vmatprep.subr.mxu0 0.0
    %105 = vmatpush1.msra.mxu0 0.0
    %106 = vmatprep.subr.mxu0 0.0
    %107 = vmatpush1.msra.mxu0 0.0
    %108 = vmatprep.subr.mxu0 0.0
    %109 = vmatpush1.msra.mxu0 0.0
    %110 = vmatprep.subr.mxu0 0.0
    %111 = vmatpush1.msra.mxu0 0.0
    %112 = vmatprep.subr.mxu0 0.0
    %113 = vmatpush1.msra.mxu0 0.0
    %114 = vmatprep.subr.mxu0 0.0
    %115 = vmatpush1.msra.mxu0 0.0
    %116 = vmatprep.subr.mxu0 0.0
    %117 = vmatpush1.msra.mxu0 0.0
    %118 = vmatprep.subr.mxu0 0.0
    %119 = vmatpush1.msra.mxu0 %v82
    %120 = vmatprep.subr.mxu0 0.0
    %121 = vmatpush1.msra.mxu0 %v81
    %122 = vmatprep.subr.mxu0 0.0
    %123 = vmatpush1.msra.mxu0 %v80
    %124 = vmatprep.subr.mxu0 0.0
    %125 = vmatpush1.msra.mxu0 %v79
    %126 = vmatprep.subr.mxu0 0.0
    %127 = vmatpush2.msra.mxu0 0.0
    %128 = vmatprep.subr.mxu0 0.0
    %129 = vmatpush2.msra.mxu0 0.0
    %130 = vmatprep.subr.mxu0 0.0
    %131 = vmatpush2.msra.mxu0 0.0
    %132 = vmatprep.subr.mxu0 0.0
    %133 = vmatpush2.msra.mxu0 0.0
    %134 = vmatprep.subr.mxu0 0.0
    %135 = vmatpush2.msra.mxu0 0.0
    %136 = vmatprep.subr.mxu0 0.0
    %137 = vmatpush2.msra.mxu0 0.0
    %138 = vmatprep.subr.mxu0 0.0
    %139 = vmatpush2.msra.mxu0 0.0
    %140 = vmatprep.subr.mxu0 0.0
    %141 = vmatpush2.msra.mxu0 0.0
    %142 = vmatprep.subr.mxu0 0.0
    %143 = vmatpush2.msra.mxu0 0.0
    %144 = vmatprep.subr.mxu0 0.0
    %145 = vmatpush2.msra.mxu0 0.0
    %146 = vmatprep.subr.mxu0 0.0
    %147 = vmatpush2.msra.mxu0 0.0
    %148 = vmatprep.subr.mxu0 0.0
    %149 = vmatpush2.msra.mxu0 0.0
    %150 = vmatprep.subr.mxu0 0.0
    %151 = vmatpush2.msra.mxu0 0.0
    %152 = vmatprep.subr.mxu0 0.0
    %153 = vmatpush2.msra.mxu0 0.0
    %154 = vmatprep.subr.mxu0 0.0
    %155 = vmatpush2.msra.mxu0 0.0
    %156 = vmatprep.subr.mxu0 0.0
    %157 = vmatpush2.msra.mxu0 0.0
    %158 = vmatprep.mubr.f32.mxu0 0.0
    %159 = vmatmul.mubr.f32.gmra.mxu0 %v92
    %v160 = vpop.f32.mrf.mxu0
    %v161 = vadd.f32 %v88, %v160
    %v162 = vpop.f32.mrf.mxu0
    %163 = vdwg.mxu0
    %v164 = vmul.f32 %v161, 0.5
    %v165 = vmul.f32 %v161, 0.70710677
    %v166 = verf.f32.pop %v165
    %v167 = vadd.f32 %v166, 1.0
    %v168 = vmul.f32 %v164, %v167
    %169 = vadd.xlane.f32.xlu0 %v168
    %v170 = vpop.xlane.xlu0 %169
    %v171 = vmul.f32 %v168, %v168
    %172 = vadd.xlane.f32.xlu0 %v171
    %v173 = vpop.xlane.xlu0 %172
    %v174 = vmul.f32 %v170, 0.03125
    %v175 = vmul.f32 %v173, 0.03125
    %v176 = vmul.f32 %v174, %v174
    %v177 = vsub.f32 %v175, %v176
    %v178 = vmax.f32 %v177, 0.0
    %v179 = vsub.f32 %v168, %v174
    %v180 = vadd.f32 %v178, 1e-05
    %v181 = vrsqrt.pop %v180
    %v182 = vmul.f32 %v179, %v181
    %v183 = vld [vmem:[%s3] sm:$0x1]
    %v185 = vlaneseq
    %v186 = vshrl.u32 %v185, 7
    %v187 = vsub.s32 0, %v186
    %v188 = vrot.slane %v183, %v187
    %v190 = vmul.f32 %v182, %v188
    %v191 = vld [vmem:[%s4] sm:$0x1]
    %v193 = vlaneseq
    %v194 = vshrl.u32 %v193, 7
    %v195 = vsub.s32 0, %v194
    %v196 = vrot.slane %v191, %v195
    %v198 = vadd.f32 %v190, %v196
    %v199 = vld [vmem:[#allocation7] sm:$0xff]
    %v200 = vld [vmem:[#allocation7 + $0x8] sm:$0xff]
    %v201 = vld [vmem:[#allocation7 + $0x10] sm:$0xff]
    %v202 = vld [vmem:[#allocation7 + $0x18] sm:$0xff]
    %v203 = vld [vmem:[#allocation7 + $0x20] sm:$0xff]
    %v204 = vld [vmem:[#allocation7 + $0x28] sm:$0xff]
    %v205 = vld [vmem:[#allocation7 + $0x30] sm:$0xff]
    %v206 = vld [vmem:[#allocation7 + $0x38] sm:$0xff]
    %v207 = vld [vmem:[#allocation7 + $0x40] sm:$0xff]
    %v208 = vld [vmem:[#allocation7 + $0x48] sm:$0xff]
    %v209 = vld [vmem:[#allocation7 + $0x50] sm:$0xff]
    %v210 = vld [vmem:[#allocation7 + $0x58] sm:$0xff]
    %v211 = vld [vmem:[#allocation7 + $0x60] sm:$0xff]
    %v212 = vld [vmem:[#allocation7 + $0x68] sm:$0xff]
    %v213 = vld [vmem:[#allocation7 + $0x70] sm:$0xff]
    %v214 = vld [vmem:[#allocation7 + $0x78] sm:$0xff]
    %215 = vmatprep.subr.mxu0 0.0
    %216 = vmatpush1.msra.mxu0 %v214
    %217 = vmatprep.subr.mxu0 0.0
    %218 = vmatpush1.msra.mxu0 %v213
    %219 = vmatprep.subr.mxu0 0.0
    %220 = vmatpush1.msra.mxu0 %v212
    %221 = vmatprep.subr.mxu0 0.0
    %222 = vmatpush1.msra.mxu0 %v211
    %223 = vmatprep.subr.mxu0 0.0
    %224 = vmatpush1.msra.mxu0 %v210
    %225 = vmatprep.subr.mxu0 0.0
    %226 = vmatpush1.msra.mxu0 %v209
    %227 = vmatprep.subr.mxu0 0.0
    %228 = vmatpush1.msra.mxu0 %v208
    %229 = vmatprep.subr.mxu0 0.0
    %230 = vmatpush1.msra.mxu0 %v207
    %231 = vmatprep.subr.mxu0 0.0
    %232 = vmatpush1.msra.mxu0 %v206
    %233 = vmatprep.subr.mxu0 0.0
    %234 = vmatpush1.msra.mxu0 %v205
    %235 = vmatprep.subr.mxu0 0.0
    %236 = vmatpush1.msra.mxu0 %v204
    %237 = vmatprep.subr.mxu0 0.0
    %238 = vmatpush1.msra.mxu0 %v203
    %239 = vmatprep.subr.mxu0 0.0
    %240 = vmatpush1.msra.mxu0 %v202
    %241 = vmatprep.subr.mxu0 0.0
    %242 = vmatpush1.msra.mxu0 %v201
    %243 = vmatprep.subr.mxu0 0.0
    %244 = vmatpush1.msra.mxu0 %v200
    %245 = vmatprep.subr.mxu0 0.0
    %246 = vmatpush1.msra.mxu0 %v199
    %247 = vmatprep.subr.mxu0 0.0
    %248 = vmatpush2.msra.mxu0 0.0
    %249 = vmatprep.subr.mxu0 0.0
    %250 = vmatpush2.msra.mxu0 0.0
    %251 = vmatprep.subr.mxu0 0.0
    %252 = vmatpush2.msra.mxu0 0.0
    %253 = vmatprep.subr.mxu0 0.0
    %254 = vmatpush2.msra.mxu0 0.0
    %255 = vmatprep.subr.mxu0 0.0
    %256 = vmatpush2.msra.mxu0 0.0
    %257 = vmatprep.subr.mxu0 0.0
    %258 = vmatpush2.msra.mxu0 0.0
    %259 = vmatprep.subr.mxu0 0.0
    %260 = vmatpush2.msra.mxu0 0.0
    %261 = vmatprep.subr.mxu0 0.0
    %262 = vmatpush2.msra.mxu0 0.0
    %263 = vmatprep.subr.mxu0 0.0
    %264 = vmatpush2.msra.mxu0 0.0
    %265 = vmatprep.subr.mxu0 0.0
    %266 = vmatpush2.msra.mxu0 0.0
    %267 = vmatprep.subr.mxu0 0.0
    %268 = vmatpush2.msra.mxu0 0.0
    %269 = vmatprep.subr.mxu0 0.0
    %270 = vmatpush2.msra.mxu0 0.0
    %271 = vmatprep.subr.mxu0 0.0
    %272 = vmatpush2.msra.mxu0 0.0
    %273 = vmatprep.subr.mxu0 0.0
    %274 = vmatpush2.msra.mxu0 0.0
    %275 = vmatprep.subr.mxu0 0.0
    %276 = vmatpush2.msra.mxu0 0.0
    %277 = vmatprep.subr.mxu0 0.0
    %278 = vmatpush2.msra.mxu0 0.0
    %279 = vmatprep.mubr.f32.mxu0 0.0
    %280 = vmatmul.mubr.f32.gmra.mxu0 %v198
    %v281 = vpop.f32.mrf.mxu0
    %v282 = vadd.f32 0.0, %v281
    %v283 = vpop.f32.mrf.mxu0
    %284 = vdwg.mxu0
    %v285 = vld [vmem:[#allocation8] sm:$0x1]
    %v287 = vlaneseq
    %v288 = vshrl.u32 %v287, 7
    %v289 = vsub.s32 0, %v288
    %v290 = vrot.slane %v285, %v289
    %v292 = vadd.f32 %v282, %v290
    %vm293 = vcmask 64512
    %294 = vst.msk [vmem:[#allocation10] sm:$0xff] %vm293, %v292
    // Predicated region
    $region46: #{arit_citation_head.1} parent=1 // pred_check
      _
    $region47: #{arit_citation_head.1} parent=1 // pred_check_branch
      %296 = sbr.rel (0) target = $region49
    $region48: #{arit_citation_head.1} parent=1 // pred_region
      %s298 = ssub.s32 128, 128
      %299 = vsyncadd [#allocation4], %s298
      %s301 = sshll.u32 [#allocation10], 4
      %s302 = int_to_ptr.vmem [resolvable:$true] %s301
      %304 = dma.vmem_to_hbm [thread:$0]  %s302, 128, %s7, [#allocation4]
    $region49: #{arit_citation_head.1} parent=1 // pred_fallthru
      _
    // Predicated region
    $region50: #{arit_citation_head.1} parent=1 // pred_check
      _
    $region51: #{arit_citation_head.1} parent=1 // pred_check_branch
      %306 = sbr.rel (0) target = $region53
    $region52: #{arit_citation_head.1} parent=1 // pred_region
      %307 = dma.done [#allocation4], 128
    $region53: #{arit_citation_head.1} parent=1 // pred_fallthru
      _
    %308 = vsyncpa [#allocation3], 1
    %309 = vsyncpa [#allocation6], 1
    %310 = vsyncpa [#allocation9], 1
    %311 = vsyncpa [#allocation4], 1

</llo_original>
